<compile_context>
chip_gen: v7x
topology: tpu7x:2x2x1
jax: 0.10.0
libtpu: 0.0.40
codegen_flags: <defaults>
</compile_context>

<pallas_src>
import functools

import jax
import jax.numpy as jnp
from jax.experimental import pallas as pl
from jax.experimental.pallas import tpu as pltpu


def _round_up(x, m):
    return (x + m - 1) // m * m


def _pick_batch_tile(batch):
    """Largest power-of-two (>=8) tile that divides the batch."""
    for tb in (512, 256, 128, 64, 32, 16, 8):
        if batch % tb == 0:
            return tb
    return batch


# ----------------------------------------------------------------------------
# Kernel: whole ICM forward (shared encoder pass + forward/inverse MLPs + MSEs)
# ----------------------------------------------------------------------------
def make_icm_kernel(batch, tile_b, obs_dim, obs_pad, action_dim, hidden_dim):
    H, A, TB = hidden_dim, action_dim, tile_b
    # static row offsets into the packed weight slab (all multiples of 8)
    o_we1 = 0
    o_we2 = o_we1 + obs_pad
    o_wf1 = o_we2 + H
    o_wf2 = o_wf1 + 2 * H
    o_wi1 = o_wf2 + H
    o_wi2 = o_wi1 + 2 * H

    # static denominators -> compile-time reciprocal multiplies
    inv_fwd_den = 1.0 / float(batch * H)
    inv_inv_den = 1.0 / float(batch * A)

    def kernel(obs_ref, act_ref, nobs_ref, w_ref, b_ref, loss_ref, acc_ref):
        step = pl.program_id(0)

        @pl.when(step == 0)
        def _init():
            acc_ref[0] = 0.0
            acc_ref[1] = 0.0

        # ---- in-kernel stack / zero-pad (no wrapper-side XLA fusions) ----
        x = jnp.concatenate([obs_ref[...], nobs_ref[...]], axis=0)  # (2TB, obs)
        if obs_pad != obs_dim:
            x = jnp.concatenate(
                [x, jnp.zeros((2 * TB, obs_pad - obs_dim), jnp.float32)],
                axis=-1)
        act = act_ref[...]                                          # (TB, A)
        if A != H:
            # Explicit zeros in lanes [A:H).  Coupled invariant: wi2 cols
            # [A:H) and bi2 lanes [A:H) are zero in the packed slab, so the
            # full-width sum below equals the real MSE numerator.
            act = jnp.concatenate(
                [act, jnp.zeros((TB, H - A), jnp.float32)], axis=-1)

        we1 = w_ref[o_we1:o_we1 + obs_pad, :]
        we2 = w_ref[o_we2:o_we2 + H, :]
        wf1 = w_ref[o_wf1:o_wf1 + 2 * H, :]   # rows [H+A, 2H) are zero
        wf2 = w_ref[o_wf2:o_wf2 + H, :]
        wi1 = w_ref[o_wi1:o_wi1 + 2 * H, :]
        wi2 = w_ref[o_wi2:o_wi2 + H, :]       # cols [A, H) are zero

        be1 = b_ref[0:1, :]
        be2 = b_ref[1:2, :]
        bf1 = b_ref[2:3, :]
        bf2 = b_ref[3:4, :]
        bi1 = b_ref[4:5, :]
        bi2 = b_ref[5:6, :]                   # lanes [A, H) are zero

        # --- shared encoder pass over the stacked [obs ; next_obs] tile ---
        h = jnp.maximum(
            jnp.dot(x, we1, preferred_element_type=jnp.float32) + be1, 0.0)
        phi_all = jnp.dot(h, we2, preferred_element_type=jnp.float32) + be2
        phi = phi_all[:TB]
        phi_next = phi_all[TB:]

        # --- forward model: MLP(cat([phi, action])) ---
        xf = jnp.concatenate([phi, act], axis=-1)                    # (TB, 2H)
        hf = jnp.maximum(
            jnp.dot(xf, wf1, preferred_element_type=jnp.float32) + bf1, 0.0)
        phi_next_pred = (
            jnp.dot(hf, wf2, preferred_element_type=jnp.float32) + bf2)

        # --- inverse model: MLP(cat([phi, phi_next])) ---
        xi = jnp.concatenate([phi, phi_next], axis=-1)               # (TB, 2H)
        hi = jnp.maximum(
            jnp.dot(xi, wi1, preferred_element_type=jnp.float32) + bi1, 0.0)
        pred_action = (
            jnp.dot(hi, wi2, preferred_element_type=jnp.float32) + bi2)

        # --- accumulate squared-error partial sums across batch tiles ---
        acc_ref[0] = acc_ref[0] + jnp.sum((phi_next_pred - phi_next) ** 2)
        acc_ref[1] = acc_ref[1] + jnp.sum((pred_action - act) ** 2)

        @pl.when(step == pl.num_programs(0) - 1)
        def _finalize():
            loss_ref[0] = acc_ref[0] * inv_fwd_den
            loss_ref[1] = acc_ref[1] * inv_inv_den

    return kernel


# ----------------------------------------------------------------------------
# Parameter construction (torch.nn.Linear-like uniform init) and slab packing
# ----------------------------------------------------------------------------
def init_linear(key, in_dim, out_dim):
    kw, kb = jax.random.split(key)
    bound = 1.0 / jnp.sqrt(jnp.float32(in_dim))
    w = jax.random.uniform(kw, (in_dim, out_dim), jnp.float32, -bound, bound)
    b = jax.random.uniform(kb, (out_dim,), jnp.float32, -bound, bound)
    return w, b


def init_icm_params(key, obs_dim, action_dim, hidden_dim):
    ks = jax.random.split(key, 6)
    p = {}
    p["we1"], p["be1"] = init_linear(ks[0], obs_dim, hidden_dim)                  # encoder.0
    p["we2"], p["be2"] = init_linear(ks[1], hidden_dim, hidden_dim)               # encoder.2
    p["wf1"], p["bf1"] = init_linear(ks[2], hidden_dim + action_dim, hidden_dim)  # forward.0
    p["wf2"], p["bf2"] = init_linear(ks[3], hidden_dim, hidden_dim)               # forward.2
    p["wi1"], p["bi1"] = init_linear(ks[4], hidden_dim * 2, hidden_dim)           # inverse.0
    p["wi2"], p["bi2"] = init_linear(ks[5], hidden_dim, action_dim)               # inverse.2
    return p


def pack_icm_params(p, obs_dim, action_dim, hidden_dim):
    """Pack all ICM weights/biases into one weight slab and one bias slab.

    Invariant (relied on by the kernel's full-width inverse-loss sum):
      * wf1 rows [H+A, 2H) are zero (action lane padding)
      * wi2 cols [A, H) and bi2 lanes [A, H) are zero
    """
    H, A = hidden_dim, action_dim
    assert H % 8 == 0 and A <= H
    obs_pad = _round_up(obs_dim, 8)
    rows = obs_pad + 7 * H

    w = jnp.zeros((rows, H), jnp.float32)
    o = 0
    w = w.at[o:o + obs_dim, :].set(p["we1"]); o = obs_pad                     # we1
    w = w.at[o:o + H, :].set(p["we2"]); o += H                                # we2
    w = w.at[o:o + H, :].set(p["wf1"][:H])                                    # wf1 (phi rows)
    w = w.at[o + H:o + H + A, :].set(p["wf1"][H:]); o += 2 * H                # wf1 (action rows)
    w = w.at[o:o + H, :].set(p["wf2"]); o += H                                # wf2
    w = w.at[o:o + 2 * H, :].set(p["wi1"]); o += 2 * H                        # wi1
    w = w.at[o:o + H, :A].set(p["wi2"]); o += H                               # wi2 (lane-padded)

    b = jnp.zeros((8, H), jnp.float32)
    b = b.at[0, :].set(p["be1"])
    b = b.at[1, :].set(p["be2"])
    b = b.at[2, :].set(p["bf1"])
    b = b.at[3, :].set(p["bf2"])
    b = b.at[4, :].set(p["bi1"])
    b = b.at[5, :A].set(p["bi2"])
    return w, b


# ----------------------------------------------------------------------------
# Wrapper: one pallas_call (gridded over batch), assembles the return values
# ----------------------------------------------------------------------------
def icm_forward(observation, action, next_observation, w_slab, b_slab,
                obs_dim, action_dim, hidden_dim, batch_tile=None):
    B = observation.shape[0]
    H, A = hidden_dim, action_dim
    obs_pad = _round_up(obs_dim, 8)
    rows = obs_pad + 7 * H

    TB = batch_tile if batch_tile is not None else _pick_batch_tile(B)
    assert B % TB == 0, "batch tile must divide batch"
    num_steps = B // TB

    kernel = make_icm_kernel(B, TB, obs_dim, obs_pad, A, H)

    # --- VMEM budget (lane/sublane padded, x2 pipeline buffers on activations,
    #     generous headroom for in-kernel intermediates).  Sized so it stays
    #     well under v7x's 32 MiB default scoped limit at these tile sizes. ---
    def lp(n):  # lane pad
        return _round_up(n, 128)

    def sp(n):  # sublane pad
        return _round_up(n, 8)

    vmem_bytes = 4 * (
        2 * 2 * sp(TB) * lp(obs_dim)          # obs + next_obs, double-buffered
        + 2 * sp(TB) * lp(A)                  # action, double-buffered
        + sp(rows) * lp(H) + 8 * lp(H)        # weight + bias slab (constant idx)
        + 2 * sp(2 * TB) * lp(obs_pad)        # x, h
        + 6 * sp(2 * TB) * lp(2 * H))         # phi_all, xf/xi, hf/hi, preds
    vmem_limit = min(int(vmem_bytes * 2) + (8 << 20), 100 << 20)

    flops = (2 * (2 * B) * obs_pad * H        # encoder layer 1
             + 2 * (2 * B) * H * H            # encoder layer 2
             + 2 * B * (2 * H) * H            # forward layer 1
             + 2 * B * H * H                  # forward layer 2
             + 2 * B * (2 * H) * H            # inverse layer 1
             + 2 * B * H * H)                 # inverse layer 2
    bytes_accessed = 4 * (2 * B * obs_dim + B * A + rows * H + 8 * H) + 8

    grid_spec = pltpu.PrefetchScalarGridSpec(
        num_scalar_prefetch=0,
        grid=(num_steps,),
        in_specs=[
            pl.BlockSpec((TB, obs_dim), lambda i: (i, 0)),   # observation
            pl.BlockSpec((TB, A), lambda i: (i, 0)),         # action
            pl.BlockSpec((TB, obs_dim), lambda i: (i, 0)),   # next_observation
            pl.BlockSpec((rows, H), lambda i: (0, 0)),       # weight slab (resident)
            pl.BlockSpec((8, H), lambda i: (0, 0)),          # bias slab (resident)
        ],
        out_specs=pl.BlockSpec((2,), lambda i: (0,),
                               memory_space=pltpu.MemorySpace.SMEM),
        scratch_shapes=[pltpu.SMEM((2,), jnp.float32)],      # loss accumulators
    )

    losses = pl.pallas_call(
        kernel,
        out_shape=jax.ShapeDtypeStruct((2,), jnp.float32),
        grid_spec=grid_spec,
        compiler_params=pltpu.CompilerParams(
            dimension_semantics=("arbitrary",),
            vmem_limit_bytes=vmem_limit),
        cost_estimate=pl.CostEstimate(
            flops=flops, transcendentals=0, bytes_accessed=bytes_accessed),
    )(observation, action, next_observation, w_slab, b_slab)

    forward_loss = losses[0]
    inverse_loss = losses[1]
    intrinsic_reward = jax.lax.stop_gradient(forward_loss)    # .detach()
    total_loss = forward_loss + inverse_loss
    # TODO(synk): torch's info dict uses .item(); returning JAX scalars avoids
    # two device->host syncs per call and keeps the wrapper jit-traceable.
    info = {"forward_loss": forward_loss, "inverse_loss": inverse_loss}
    return intrinsic_reward, total_loss, info


# Pure-JAX reference (mirrors the PyTorch module) for verification.
def icm_reference(observation, action, next_observation, p):
    def enc(x):
        return jax.nn.relu(x @ p["we1"] + p["be1"]) @ p["we2"] + p["be2"]

    phi = enc(observation)
    phi_next = enc(next_observation)
    hf = jax.nn.relu(jnp.concatenate([phi, action], -1) @ p["wf1"] + p["bf1"])
    phi_next_pred = hf @ p["wf2"] + p["bf2"]
    forward_loss = jnp.mean((phi_next_pred - phi_next) ** 2)
    hi = jax.nn.relu(jnp.concatenate([phi, phi_next], -1) @ p["wi1"] + p["bi1"])
    pred_action = hi @ p["wi2"] + p["bi2"]
    inverse_loss = jnp.mean((pred_action - action) ** 2)
    return forward_loss, inverse_loss


if __name__ == "__main__":
    batch, obs_dim, action_dim, hidden_dim = 8, 16, 8, 32

    key = jax.random.PRNGKey(0)
    k_obs, k_act, k_next, k_params = jax.random.split(key, 4)
    observation = jax.random.normal(k_obs, (batch, obs_dim), jnp.float32)
    action = jax.random.normal(k_act, (batch, action_dim), jnp.float32)
    next_observation = jax.random.normal(k_next, (batch, obs_dim), jnp.float32)

    params = init_icm_params(k_params, obs_dim, action_dim, hidden_dim)
    w_slab, b_slab = pack_icm_params(params, obs_dim, action_dim, hidden_dim)

    icm = jax.jit(functools.partial(
        icm_forward, obs_dim=obs_dim, action_dim=action_dim,
        hidden_dim=hidden_dim))

    intrinsic_reward, total_loss, info = icm(
        observation, action, next_observation, w_slab, b_slab)
    jax.block_until_ready(total_loss)

    # Cross-check against the pure-JAX reference.
    ref_fwd, ref_inv = icm_reference(observation, action, next_observation, params)
    assert abs(float(ref_fwd) - float(info["forward_loss"])) < 1e-4
    assert abs(float(ref_inv) - float(info["inverse_loss"])) < 1e-4
    assert abs(float(ref_fwd + ref_inv) - float(total_loss)) < 1e-4
    assert abs(float(ref_fwd) - float(intrinsic_reward)) < 1e-4

    print("KERNEL_OK")
</pallas_src>

<mosaic_0001>
module attributes {stable_mosaic.version = 11 : i64} {
  func.func @kernel(%arg0: i32, %arg1: memref<8x16xf32, #tpu.memory_space<vmem>>, %arg2: memref<8x8xf32, #tpu.memory_space<vmem>>, %arg3: memref<8x16xf32, #tpu.memory_space<vmem>>, %arg4: memref<240x32xf32, #tpu.memory_space<vmem>>, %arg5: memref<8x32xf32, #tpu.memory_space<vmem>>, %arg6: memref<2xf32, #tpu.memory_space<smem>>, %arg7: memref<2xf32, #tpu.memory_space<smem>>) attributes {dimension_semantics = [#tpu.dimension_semantics<arbitrary>], iteration_bounds = array<i64: 1>, scalar_prefetch = 0 : i64, scratch_operands = 1 : i64, tpu.core_type = #tpu.core_type<tc>, window_params = [{transform_indices = @transform_0, window_bounds = array<i64: 8, 16>}, {transform_indices = @transform_1, window_bounds = array<i64: 8, 8>}, {transform_indices = @transform_2, window_bounds = array<i64: 8, 16>}, {pipeline_mode = #tpu.pipeline_mode<synchronous>, transform_indices = @transform_3, window_bounds = array<i64: 240, 32>}, {pipeline_mode = #tpu.pipeline_mode<synchronous>, transform_indices = @transform_4, window_bounds = array<i64: 8, 32>}, {transform_indices = @transform_5, window_bounds = array<i64: 2>}]} {
    %c0_i32 = arith.constant 0 : i32
    %0 = arith.cmpi eq, %arg0, %c0_i32 : i32
    %1 = arith.extui %0 : i1 to i32
    %c0_i32_0 = arith.constant 0 : i32
    %2 = arith.cmpi ne, %1, %c0_i32_0 : i32
    scf.if %2 {
      %cst_37 = arith.constant 0.000000e+00 : f32
      %c0_38 = arith.constant 0 : index
      %70 = memref.load %arg7[%c0_38] : memref<2xf32, #tpu.memory_space<smem>>
      memref.store %cst_37, %arg7[%c0_38] : memref<2xf32, #tpu.memory_space<smem>>
      %cst_39 = arith.constant 0.000000e+00 : f32
      %c1_40 = arith.constant 1 : index
      %71 = memref.load %arg7[%c1_40] : memref<2xf32, #tpu.memory_space<smem>>
      memref.store %cst_39, %arg7[%c1_40] : memref<2xf32, #tpu.memory_space<smem>>
    } else {
    }
    %c0 = arith.constant 0 : index
    %c0_1 = arith.constant 0 : index
    %3 = vector.load %arg1[%c0, %c0_1] : memref<8x16xf32, #tpu.memory_space<vmem>>, vector<8x16xf32>
    %c0_2 = arith.constant 0 : index
    %c0_3 = arith.constant 0 : index
    %4 = vector.load %arg3[%c0_2, %c0_3] : memref<8x16xf32, #tpu.memory_space<vmem>>, vector<8x16xf32>
    %5 = tpu.concatenate %3, %4 in 0 : vector<8x16xf32>, vector<8x16xf32> -> vector<16x16xf32>
    %c0_4 = arith.constant 0 : index
    %c0_5 = arith.constant 0 : index
    %6 = vector.load %arg2[%c0_4, %c0_5] : memref<8x8xf32, #tpu.memory_space<vmem>>, vector<8x8xf32>
    %cst = arith.constant 0.000000e+00 : f32
    %7 = vector.broadcast %cst : f32 to vector<8x24xf32>
    %8 = tpu.concatenate %6, %7 in 1 : vector<8x8xf32>, vector<8x24xf32> -> vector<8x32xf32>
    %c0_6 = arith.constant 0 : index
    %c0_7 = arith.constant 0 : index
    %9 = vector.load %arg4[%c0_6, %c0_7] : memref<240x32xf32, #tpu.memory_space<vmem>>, vector<16x32xf32>
    %c16 = arith.constant 16 : index
    %c0_8 = arith.constant 0 : index
    %10 = vector.load %arg4[%c16, %c0_8] : memref<240x32xf32, #tpu.memory_space<vmem>>, vector<32x32xf32>
    %c48 = arith.constant 48 : index
    %c0_9 = arith.constant 0 : index
    %11 = vector.load %arg4[%c48, %c0_9] : memref<240x32xf32, #tpu.memory_space<vmem>>, vector<64x32xf32>
    %c112 = arith.constant 112 : index
    %c0_10 = arith.constant 0 : index
    %12 = vector.load %arg4[%c112, %c0_10] : memref<240x32xf32, #tpu.memory_space<vmem>>, vector<32x32xf32>
    %c144 = arith.constant 144 : index
    %c0_11 = arith.constant 0 : index
    %13 = vector.load %arg4[%c144, %c0_11] : memref<240x32xf32, #tpu.memory_space<vmem>>, vector<64x32xf32>
    %c208 = arith.constant 208 : index
    %c0_12 = arith.constant 0 : index
    %14 = vector.load %arg4[%c208, %c0_12] : memref<240x32xf32, #tpu.memory_space<vmem>>, vector<32x32xf32>
    %c0_13 = arith.constant 0 : index
    %c0_14 = arith.constant 0 : index
    %15 = vector.load %arg5[%c0_13, %c0_14] : memref<8x32xf32, #tpu.memory_space<vmem>>, vector<1x32xf32>
    %c1 = arith.constant 1 : index
    %c0_15 = arith.constant 0 : index
    %16 = vector.load %arg5[%c1, %c0_15] : memref<8x32xf32, #tpu.memory_space<vmem>>, vector<1x32xf32>
    %c2 = arith.constant 2 : index
    %c0_16 = arith.constant 0 : index
    %17 = vector.load %arg5[%c2, %c0_16] : memref<8x32xf32, #tpu.memory_space<vmem>>, vector<1x32xf32>
    %c3 = arith.constant 3 : index
    %c0_17 = arith.constant 0 : index
    %18 = vector.load %arg5[%c3, %c0_17] : memref<8x32xf32, #tpu.memory_space<vmem>>, vector<1x32xf32>
    %c4 = arith.constant 4 : index
    %c0_18 = arith.constant 0 : index
    %19 = vector.load %arg5[%c4, %c0_18] : memref<8x32xf32, #tpu.memory_space<vmem>>, vector<1x32xf32>
    %c5 = arith.constant 5 : index
    %c0_19 = arith.constant 0 : index
    %20 = vector.load %arg5[%c5, %c0_19] : memref<8x32xf32, #tpu.memory_space<vmem>>, vector<1x32xf32>
    %cst_20 = arith.constant dense<0.000000e+00> : vector<16x32xf32>
    %21 = tpu.matmul %5, %9, %cst_20 {dimension_numbers = #tpu.dot_dimension_numbers<[1], [0], [0], [1], [0, 0, 1, 1], [], []>} : vector<16x16xf32>, vector<16x32xf32>, vector<16x32xf32> -> vector<16x32xf32>
    %22 = vector.broadcast %15 : vector<1x32xf32> to vector<16x32xf32>
    %23 = arith.addf %21, %22 : vector<16x32xf32>
    %cst_21 = arith.constant 0.000000e+00 : f32
    %24 = vector.broadcast %cst_21 : f32 to vector<16x32xf32>
    %25 = arith.maximumf %23, %24 : vector<16x32xf32>
    %cst_22 = arith.constant dense<0.000000e+00> : vector<16x32xf32>
    %26 = tpu.matmul %25, %10, %cst_22 {dimension_numbers = #tpu.dot_dimension_numbers<[1], [0], [0], [1], [0, 0, 1, 1], [], []>} : vector<16x32xf32>, vector<32x32xf32>, vector<16x32xf32> -> vector<16x32xf32>
    %27 = vector.broadcast %16 : vector<1x32xf32> to vector<16x32xf32>
    %28 = arith.addf %26, %27 : vector<16x32xf32>
    %29 = vector.extract_strided_slice %28 {offsets = [0, 0], sizes = [8, 32], strides = [1, 1]} : vector<16x32xf32> to vector<8x32xf32>
    %30 = vector.extract_strided_slice %28 {offsets = [8, 0], sizes = [8, 32], strides = [1, 1]} : vector<16x32xf32> to vector<8x32xf32>
    %31 = tpu.concatenate %29, %8 in 1 : vector<8x32xf32>, vector<8x32xf32> -> vector<8x64xf32>
    %cst_23 = arith.constant dense<0.000000e+00> : vector<8x32xf32>
    %32 = tpu.matmul %31, %11, %cst_23 {dimension_numbers = #tpu.dot_dimension_numbers<[1], [0], [0], [1], [0, 0, 1, 1], [], []>} : vector<8x64xf32>, vector<64x32xf32>, vector<8x32xf32> -> vector<8x32xf32>
    %33 = vector.broadcast %17 : vector<1x32xf32> to vector<8x32xf32>
    %34 = arith.addf %32, %33 : vector<8x32xf32>
    %cst_24 = arith.constant 0.000000e+00 : f32
    %35 = vector.broadcast %cst_24 : f32 to vector<8x32xf32>
    %36 = arith.maximumf %34, %35 : vector<8x32xf32>
    %cst_25 = arith.constant dense<0.000000e+00> : vector<8x32xf32>
    %37 = tpu.matmul %36, %12, %cst_25 {dimension_numbers = #tpu.dot_dimension_numbers<[1], [0], [0], [1], [0, 0, 1, 1], [], []>} : vector<8x32xf32>, vector<32x32xf32>, vector<8x32xf32> -> vector<8x32xf32>
    %38 = vector.broadcast %18 : vector<1x32xf32> to vector<8x32xf32>
    %39 = arith.addf %37, %38 : vector<8x32xf32>
    %40 = tpu.concatenate %29, %30 in 1 : vector<8x32xf32>, vector<8x32xf32> -> vector<8x64xf32>
    %cst_26 = arith.constant dense<0.000000e+00> : vector<8x32xf32>
    %41 = tpu.matmul %40, %13, %cst_26 {dimension_numbers = #tpu.dot_dimension_numbers<[1], [0], [0], [1], [0, 0, 1, 1], [], []>} : vector<8x64xf32>, vector<64x32xf32>, vector<8x32xf32> -> vector<8x32xf32>
    %42 = vector.broadcast %19 : vector<1x32xf32> to vector<8x32xf32>
    %43 = arith.addf %41, %42 : vector<8x32xf32>
    %cst_27 = arith.constant 0.000000e+00 : f32
    %44 = vector.broadcast %cst_27 : f32 to vector<8x32xf32>
    %45 = arith.maximumf %43, %44 : vector<8x32xf32>
    %cst_28 = arith.constant dense<0.000000e+00> : vector<8x32xf32>
    %46 = tpu.matmul %45, %14, %cst_28 {dimension_numbers = #tpu.dot_dimension_numbers<[1], [0], [0], [1], [0, 0, 1, 1], [], []>} : vector<8x32xf32>, vector<32x32xf32>, vector<8x32xf32> -> vector<8x32xf32>
    %47 = vector.broadcast %20 : vector<1x32xf32> to vector<8x32xf32>
    %48 = arith.addf %46, %47 : vector<8x32xf32>
    %c0_29 = arith.constant 0 : index
    %49 = memref.load %arg7[%c0_29] : memref<2xf32, #tpu.memory_space<smem>>
    %50 = arith.subf %39, %30 : vector<8x32xf32>
    %51 = arith.mulf %50, %50 : vector<8x32xf32>
    %52 = vector.shape_cast %51 : vector<8x32xf32> to vector<1x8x32xf32>
    %cst_30 = arith.constant dense<0.000000e+00> : vector<1xf32>
    %53 = vector.multi_reduction <add>, %52, %cst_30 [1, 2] : vector<1x8x32xf32> to vector<1xf32>
    %54 = vector.shape_cast %53 : vector<1xf32> to vector<1x1x1xf32>
    %55 = vector.extract %54[0, 0, 0] : f32 from vector<1x1x1xf32>
    %56 = arith.addf %49, %55 : f32
    %c0_31 = arith.constant 0 : index
    %57 = memref.load %arg7[%c0_31] : memref<2xf32, #tpu.memory_space<smem>>
    memref.store %56, %arg7[%c0_31] : memref<2xf32, #tpu.memory_space<smem>>
    %c1_32 = arith.constant 1 : index
    %58 = memref.load %arg7[%c1_32] : memref<2xf32, #tpu.memory_space<smem>>
    %59 = arith.subf %48, %8 : vector<8x32xf32>
    %60 = arith.mulf %59, %59 : vector<8x32xf32>
    %61 = vector.shape_cast %60 : vector<8x32xf32> to vector<1x8x32xf32>
    %cst_33 = arith.constant dense<0.000000e+00> : vector<1xf32>
    %62 = vector.multi_reduction <add>, %61, %cst_33 [1, 2] : vector<1x8x32xf32> to vector<1xf32>
    %63 = vector.shape_cast %62 : vector<1xf32> to vector<1x1x1xf32>
    %64 = vector.extract %63[0, 0, 0] : f32 from vector<1x1x1xf32>
    %65 = arith.addf %58, %64 : f32
    %c1_34 = arith.constant 1 : index
    %66 = memref.load %arg7[%c1_34] : memref<2xf32, #tpu.memory_space<smem>>
    memref.store %65, %arg7[%c1_34] : memref<2xf32, #tpu.memory_space<smem>>
    %c0_i32_35 = arith.constant 0 : i32
    %67 = arith.cmpi eq, %arg0, %c0_i32_35 : i32
    %68 = arith.extui %67 : i1 to i32
    %c0_i32_36 = arith.constant 0 : i32
    %69 = arith.cmpi ne, %68, %c0_i32_36 : i32
    scf.if %69 {
      %c0_37 = arith.constant 0 : index
      %70 = memref.load %arg7[%c0_37] : memref<2xf32, #tpu.memory_space<smem>>
      %cst_38 = arith.constant 3.906250e-03 : f32
      %71 = arith.mulf %70, %cst_38 : f32
      %c0_39 = arith.constant 0 : index
      %72 = memref.load %arg6[%c0_39] : memref<2xf32, #tpu.memory_space<smem>>
      memref.store %71, %arg6[%c0_39] : memref<2xf32, #tpu.memory_space<smem>>
      %c1_40 = arith.constant 1 : index
      %73 = memref.load %arg7[%c1_40] : memref<2xf32, #tpu.memory_space<smem>>
      %cst_41 = arith.constant 1.562500e-02 : f32
      %74 = arith.mulf %73, %cst_41 : f32
      %c1_42 = arith.constant 1 : index
      %75 = memref.load %arg6[%c1_42] : memref<2xf32, #tpu.memory_space<smem>>
      memref.store %74, %arg6[%c1_42] : memref<2xf32, #tpu.memory_space<smem>>
    } else {
    }
    return
  }
  func.func @transform_0(%arg0: i32) -> (i32, i32) {
    %c0_i32 = arith.constant 0 : i32
    %c0_i32_0 = arith.constant 0 : i32
    return %arg0, %c0_i32 : i32, i32
  }
  func.func @transform_1(%arg0: i32) -> (i32, i32) {
    %c0_i32 = arith.constant 0 : i32
    %c0_i32_0 = arith.constant 0 : i32
    return %arg0, %c0_i32 : i32, i32
  }
  func.func @transform_2(%arg0: i32) -> (i32, i32) {
    %c0_i32 = arith.constant 0 : i32
    %c0_i32_0 = arith.constant 0 : i32
    return %arg0, %c0_i32 : i32, i32
  }
  func.func @transform_3(%arg0: i32) -> (i32, i32) {
    %c0_i32 = arith.constant 0 : i32
    %c0_i32_0 = arith.constant 0 : i32
    %c0_i32_1 = arith.constant 0 : i32
    return %c0_i32, %c0_i32_0 : i32, i32
  }
  func.func @transform_4(%arg0: i32) -> (i32, i32) {
    %c0_i32 = arith.constant 0 : i32
    %c0_i32_0 = arith.constant 0 : i32
    %c0_i32_1 = arith.constant 0 : i32
    return %c0_i32, %c0_i32_0 : i32, i32
  }
  func.func @transform_5(%arg0: i32) -> i32 {
    %c0_i32 = arith.constant 0 : i32
    %c0_i32_0 = arith.constant 0 : i32
    return %c0_i32 : i32
  }
}

</mosaic_0001>

<llo_original>
// kernel: icm_forward.1
$region0: #{icm_forward.1}
  #allocation0 [shape = 'u32[]', space=smem, size = 0x4, offset = 0x4, fixed_abs, tag = 'smem constant byte address 0x4 - core index']
  #allocation1 [shape = 'u32[144,128]{1,0:T(1,128)}', space=vmem, size = 0x12000, scoped, tag = 'internal scratch']
  #allocation2 [shape = 'f32[2]{0:T(128)}', space=smem, size = 0x200, scoped, tag = 'scratch operand']
  %s0 = inlined_call_operand.vmem [shape: f32[8,16], index: 0, kind: input, shape index: {}]
  %s1 = inlined_call_operand.vmem [shape: f32[8,8], index: 1, kind: input, shape index: {}]
  %s2 = inlined_call_operand.vmem [shape: f32[8,16], index: 2, kind: input, shape index: {}]
  %s3 = inlined_call_operand.vmem [shape: f32[240,32], index: 3, kind: input, shape index: {}]
  %s4 = inlined_call_operand.vmem [shape: f32[8,32], index: 4, kind: input, shape index: {}]
  %s5 = inlined_call_operand.vmem [shape: f32[2], index: 5, kind: output, shape index: {}]
  %s6 = sld [smem:[#allocation0]]
  $region38: #{icm_forward.1} parent=0
    _
  %s8 = ssub.s32 1, %s6
  %s9 = scalar_select 0, %s8, %s6
  $region1: #{icm_forward.1} parent=0
    #allocation3 [shape = 'u8[512]{0}', space=smem, size = 0x200, scoped, tag = 'output window, operand 0, single buffered']
    #allocation4 [shape = 's32[1]{0}', space=sflag, size = 0x4, scoped, tag = 'scoped memory for icm_forward.1']
    %10 = vsyncpa [#allocation4], 0
    // Predicated region
    $region2: #{icm_forward.1} parent=1 // pred_check
      _
    $region3: #{icm_forward.1} parent=1 // pred_check_branch
      %12 = sbr.rel (0) target = $region5
    $region4: #{icm_forward.1} parent=1 // pred_region
      _
    $region5: #{icm_forward.1} parent=1 // pred_fallthru
      _
    // Predicated region
    $region6: #{icm_forward.1} parent=1 // pred_check
      _
    $region7: #{icm_forward.1} parent=1 // pred_check_branch
      %14 = sbr.rel (0) target = $region9
    $region8: #{icm_forward.1} parent=1 // pred_region
      _
    $region9: #{icm_forward.1} parent=1 // pred_fallthru
      _
    // Predicated region
    $region10: #{icm_forward.1} parent=1 // pred_check
      _
    $region11: #{icm_forward.1} parent=1 // pred_check_branch
      %16 = sbr.rel (0) target = $region13
    $region12: #{icm_forward.1} parent=1 // pred_region
      _
    $region13: #{icm_forward.1} parent=1 // pred_fallthru
      _
    // Predicated region
    $region14: #{icm_forward.1} parent=1 // pred_check
      _
    $region15: #{icm_forward.1} parent=1 // pred_check_branch
      %18 = sbr.rel (0) target = $region17
    $region16: #{icm_forward.1} parent=1 // pred_region
      _
    $region17: #{icm_forward.1} parent=1 // pred_fallthru
      _
    // Predicated region
    $region18: #{icm_forward.1} parent=1 // pred_check
      _
    $region19: #{icm_forward.1} parent=1 // pred_check_branch
      %20 = sbr.rel (0) target = $region21
    $region20: #{icm_forward.1} parent=1 // pred_region
      _
    $region21: #{icm_forward.1} parent=1 // pred_fallthru
      _
    %p21 = scmp.eq.s32.totalorder 0, 0
    // Predicated region
    $region22: #{icm_forward.1} parent=1 // pred_check
      %p22 = pneg %p21
    $region23: #{icm_forward.1} parent=1 // pred_check_branch
      %24 = sbr.rel (%p22) target = $region25
    $region24: #{icm_forward.1} parent=1 // pred_region
      %s25 = scalar_lea.smem [#allocation2], 0
      %26 = sst [smem:[%s25]] 0.0
      %s27 = scalar_lea.smem [#allocation2], 1
      %28 = sst [smem:[%s27]] 0.0
    $region25: #{icm_forward.1} parent=1 // pred_fallthru
      _
    %v29 = vld [vmem:[%s0] sm:$0xff]
    %v30 = vld [vmem:[%s2] sm:$0xff]
    %v31 = vld [vmem:[%s1] sm:$0xff]
    %vm32 = vcmask 64512
    %v33 = vsel %vm32, %v31, 0.0
    %v34 = vld [vmem:[%s3] sm:$0xff]
    %v35 = vld [vmem:[%s3 + $0x8] sm:$0xff]
    %v36 = vld [vmem:[%s3 + $0x10] sm:$0xff]
    %v37 = vld [vmem:[%s3 + $0x18] sm:$0xff]
    %v38 = vld [vmem:[%s3 + $0x20] sm:$0xff]
    %v39 = vld [vmem:[%s3 + $0x28] sm:$0xff]
    %v40 = vld [vmem:[%s3 + $0x30] sm:$0xff]
    %v41 = vld [vmem:[%s3 + $0x38] sm:$0xff]
    %v42 = vld [vmem:[%s3 + $0x40] sm:$0xff]
    %v43 = vld [vmem:[%s3 + $0x48] sm:$0xff]
    %v44 = vld [vmem:[%s3 + $0x50] sm:$0xff]
    %v45 = vld [vmem:[%s3 + $0x58] sm:$0xff]
    %v46 = vld [vmem:[%s3 + $0x60] sm:$0xff]
    %v47 = vld [vmem:[%s3 + $0x68] sm:$0xff]
    %v48 = vld [vmem:[%s3 + $0x70] sm:$0xff]
    %v49 = vld [vmem:[%s3 + $0x78] sm:$0xff]
    %v50 = vld [vmem:[%s3 + $0x80] sm:$0xff]
    %v51 = vld [vmem:[%s3 + $0x88] sm:$0xff]
    %v52 = vld [vmem:[%s3 + $0x90] sm:$0xff]
    %v53 = vld [vmem:[%s3 + $0x98] sm:$0xff]
    %v54 = vld [vmem:[%s3 + $0xa0] sm:$0xff]
    %v55 = vld [vmem:[%s3 + $0xa8] sm:$0xff]
    %v56 = vld [vmem:[%s3 + $0xb0] sm:$0xff]
    %v57 = vld [vmem:[%s3 + $0xb8] sm:$0xff]
    %v58 = vld [vmem:[%s3 + $0xc0] sm:$0xff]
    %v59 = vld [vmem:[%s3 + $0xc8] sm:$0xff]
    %v60 = vld [vmem:[%s3 + $0xd0] sm:$0xff]
    %v61 = vld [vmem:[%s3 + $0xd8] sm:$0xff]
    %v62 = vld [vmem:[%s3 + $0xe0] sm:$0xff]
    %v63 = vld [vmem:[%s3 + $0xe8] sm:$0xff]
    %v64 = vld [vmem:[%s4] sm:$0x1]
    %v65 = vld [vmem:[%s4 + $0x1] sm:$0x1]
    %v66 = vld [vmem:[%s4 + $0x2] sm:$0x1]
    %v67 = vld [vmem:[%s4 + $0x3] sm:$0x1]
    %v68 = vld [vmem:[%s4 + $0x4] sm:$0x1]
    %v69 = vld [vmem:[%s4 + $0x5] sm:$0x1]
    %v70 = vlaneseq
    %v71 = vshrl.u32 %v70, 7
    %v72 = vsub.s32 0, %v71
    %v73 = vrot.slane %v64, %v72
    %vm74 = vcmask 130048
    %v76 = vsel %vm74, %v29, 0
    %v79 = vsel %vm74, %v30, 0
    %81 = vmatprep.subr.mxu0 0.0
    %82 = vmatpush1.msra.mxu0 %v34
    %83 = vmatprep.subr.mxu0 0.0
    %84 = vmatpush1.msra.mxu0 %v35
    %85 = vmatprep.subr.mxu0 0.0
    %86 = vmatpush1.msra.mxu0 0.0
    %87 = vmatprep.subr.mxu0 0.0
    %88 = vmatpush1.msra.mxu0 0.0
    %89 = vmatprep.subr.mxu0 0.0
    %90 = vmatpush1.msra.mxu0 0.0
    %91 = vmatprep.subr.mxu0 0.0
    %92 = vmatpush1.msra.mxu0 0.0
    %93 = vmatprep.subr.mxu0 0.0
    %94 = vmatpush1.msra.mxu0 0.0
    %95 = vmatprep.subr.mxu0 0.0
    %96 = vmatpush1.msra.mxu0 0.0
    %97 = vmatprep.subr.mxu0 0.0
    %98 = vmatpush1.msra.mxu0 0.0
    %99 = vmatprep.subr.mxu0 0.0
    %100 = vmatpush1.msra.mxu0 0.0
    %101 = vmatprep.subr.mxu0 0.0
    %102 = vmatpush1.msra.mxu0 0.0
    %103 = vmatprep.subr.mxu0 0.0
    %104 = vmatpush1.msra.mxu0 0.0
    %105 = vmatprep.subr.mxu0 0.0
    %106 = vmatpush1.msra.mxu0 0.0
    %107 = vmatprep.subr.mxu0 0.0
    %108 = vmatpush1.msra.mxu0 0.0
    %109 = vmatprep.subr.mxu0 0.0
    %110 = vmatpush1.msra.mxu0 0.0
    %111 = vmatprep.subr.mxu0 0.0
    %112 = vmatpush1.msra.mxu0 0.0
    %113 = vmatprep.subr.mxu0 0.0
    %114 = vmatpush1.msra.mxu0 0.0
    %115 = vmatprep.subr.mxu0 0.0
    %116 = vmatpush1.msra.mxu0 0.0
    %117 = vmatprep.subr.mxu0 0.0
    %118 = vmatpush1.msra.mxu0 0.0
    %119 = vmatprep.subr.mxu0 0.0
    %120 = vmatpush1.msra.mxu0 0.0
    %121 = vmatprep.subr.mxu0 0.0
    %122 = vmatpush1.msra.mxu0 0.0
    %123 = vmatprep.subr.mxu0 0.0
    %124 = vmatpush1.msra.mxu0 0.0
    %125 = vmatprep.subr.mxu0 0.0
    %126 = vmatpush1.msra.mxu0 0.0
    %127 = vmatprep.subr.mxu0 0.0
    %128 = vmatpush1.msra.mxu0 0.0
    %129 = vmatprep.subr.mxu0 0.0
    %130 = vmatpush1.msra.mxu0 0.0
    %131 = vmatprep.subr.mxu0 0.0
    %132 = vmatpush1.msra.mxu0 0.0
    %133 = vmatprep.subr.mxu0 0.0
    %134 = vmatpush1.msra.mxu0 0.0
    %135 = vmatprep.subr.mxu0 0.0
    %136 = vmatpush1.msra.mxu0 0.0
    %137 = vmatprep.subr.mxu0 0.0
    %138 = vmatpush1.msra.mxu0 0.0
    %139 = vmatprep.subr.mxu0 0.0
    %140 = vmatpush1.msra.mxu0 0.0
    %141 = vmatprep.subr.mxu0 0.0
    %142 = vmatpush1.msra.mxu0 0.0
    %143 = vmatprep.subr.mxu0 0.0
    %144 = vmatpush1.msra.mxu0 0.0
    %145 = vmatprep.mubr.f32.mxu0 0.0
    %146 = vmatmul.mubr.f32.gmra.mrb[0].mxu0 %v76
    %v147 = vpop.f32.mrb[0].mxu0
    %v148 = vadd.f32 %v73, %v147
    %v149 = vpop.f32.mrb[0].mxu0
    %150 = vmatprep.mubr.f32.mxu0 0.0
    %151 = vmatmul.mubr.f32.gmra.mrb[0].mxu0 %v79
    %v152 = vpop.f32.mrb[0].mxu0
    %v153 = vadd.f32 %v73, %v152
    %v154 = vpop.f32.mrb[0].mxu0
    %155 = vdwg.mxu0
    %v156 = vmax.f32 %v148, 0.0
    %v157 = vmax.f32 %v153, 0.0
    %v158 = vlaneseq
    %v159 = vshrl.u32 %v158, 7
    %v160 = vsub.s32 0, %v159
    %v161 = vrot.slane %v65, %v160
    %vm162 = vcmask 261120
    %v164 = vsel %vm162, %v156, 0
    %v167 = vsel %vm162, %v157, 0
    %169 = vmatprep.subr.mxu0 0.0
    %170 = vmatpush1.msra.mxu0 %v36
    %171 = vmatprep.subr.mxu0 0.0
    %172 = vmatpush1.msra.mxu0 %v37
    %173 = vmatprep.subr.mxu0 0.0
    %174 = vmatpush1.msra.mxu0 %v38
    %175 = vmatprep.subr.mxu0 0.0
    %176 = vmatpush1.msra.mxu0 %v39
    %177 = vmatprep.subr.mxu0 0.0
    %178 = vmatpush1.msra.mxu0 0.0
    %179 = vmatprep.subr.mxu0 0.0
    %180 = vmatpush1.msra.mxu0 0.0
    %181 = vmatprep.subr.mxu0 0.0
    %182 = vmatpush1.msra.mxu0 0.0
    %183 = vmatprep.subr.mxu0 0.0
    %184 = vmatpush1.msra.mxu0 0.0
    %185 = vmatprep.subr.mxu0 0.0
    %186 = vmatpush1.msra.mxu0 0.0
    %187 = vmatprep.subr.mxu0 0.0
    %188 = vmatpush1.msra.mxu0 0.0
    %189 = vmatprep.subr.mxu0 0.0
    %190 = vmatpush1.msra.mxu0 0.0
    %191 = vmatprep.subr.mxu0 0.0
    %192 = vmatpush1.msra.mxu0 0.0
    %193 = vmatprep.subr.mxu0 0.0
    %194 = vmatpush1.msra.mxu0 0.0
    %195 = vmatprep.subr.mxu0 0.0
    %196 = vmatpush1.msra.mxu0 0.0
    %197 = vmatprep.subr.mxu0 0.0
    %198 = vmatpush1.msra.mxu0 0.0
    %199 = vmatprep.subr.mxu0 0.0
    %200 = vmatpush1.msra.mxu0 0.0
    %201 = vmatprep.subr.mxu0 0.0
    %202 = vmatpush1.msra.mxu0 0.0
    %203 = vmatprep.subr.mxu0 0.0
    %204 = vmatpush1.msra.mxu0 0.0
    %205 = vmatprep.subr.mxu0 0.0
    %206 = vmatpush1.msra.mxu0 0.0
    %207 = vmatprep.subr.mxu0 0.0
    %208 = vmatpush1.msra.mxu0 0.0
    %209 = vmatprep.subr.mxu0 0.0
    %210 = vmatpush1.msra.mxu0 0.0
    %211 = vmatprep.subr.mxu0 0.0
    %212 = vmatpush1.msra.mxu0 0.0
    %213 = vmatprep.subr.mxu0 0.0
    %214 = vmatpush1.msra.mxu0 0.0
    %215 = vmatprep.subr.mxu0 0.0
    %216 = vmatpush1.msra.mxu0 0.0
    %217 = vmatprep.subr.mxu0 0.0
    %218 = vmatpush1.msra.mxu0 0.0
    %219 = vmatprep.subr.mxu0 0.0
    %220 = vmatpush1.msra.mxu0 0.0
    %221 = vmatprep.subr.mxu0 0.0
    %222 = vmatpush1.msra.mxu0 0.0
    %223 = vmatprep.subr.mxu0 0.0
    %224 = vmatpush1.msra.mxu0 0.0
    %225 = vmatprep.subr.mxu0 0.0
    %226 = vmatpush1.msra.mxu0 0.0
    %227 = vmatprep.subr.mxu0 0.0
    %228 = vmatpush1.msra.mxu0 0.0
    %229 = vmatprep.subr.mxu0 0.0
    %230 = vmatpush1.msra.mxu0 0.0
    %231 = vmatprep.subr.mxu0 0.0
    %232 = vmatpush1.msra.mxu0 0.0
    %233 = vmatprep.mubr.f32.mxu0 0.0
    %234 = vmatmul.mubr.f32.gmra.mrb[0].mxu0 %v164
    %v235 = vpop.f32.mrb[0].mxu0
    %v236 = vadd.f32 %v161, %v235
    %v237 = vpop.f32.mrb[0].mxu0
    %238 = vmatprep.mubr.f32.mxu0 0.0
    %239 = vmatmul.mubr.f32.gmra.mrb[0].mxu0 %v167
    %v240 = vpop.f32.mrb[0].mxu0
    %v241 = vadd.f32 %v161, %v240
    %v242 = vpop.f32.mrb[0].mxu0
    %243 = vdwg.mxu0
    %245 = vrot.lane.b32.xlu0 %v33, 32
    %v246 = vpop.permute.xlu0 %245
    %v248 = vsel %vm162, %v236, %v246
    %v249 = vlaneseq
    %v250 = vshrl.u32 %v249, 7
    %v251 = vsub.s32 0, %v250
    %v252 = vrot.slane %v66, %v251
    %vm253 = vcmask 523264
    %v255 = vsel %vm253, %v248, 0
    %257 = vmatprep.subr.mxu0 0.0
    %258 = vmatpush1.msra.mxu0 %v40
    %259 = vmatprep.subr.mxu0 0.0
    %260 = vmatpush1.msra.mxu0 %v41
    %261 = vmatprep.subr.mxu0 0.0
    %262 = vmatpush1.msra.mxu0 %v42
    %263 = vmatprep.subr.mxu0 0.0
    %264 = vmatpush1.msra.mxu0 %v43
    %265 = vmatprep.subr.mxu0 0.0
    %266 = vmatpush1.msra.mxu0 %v44
    %267 = vmatprep.subr.mxu0 0.0
    %268 = vmatpush1.msra.mxu0 %v45
    %269 = vmatprep.subr.mxu0 0.0
    %270 = vmatpush1.msra.mxu0 %v46
    %271 = vmatprep.subr.mxu0 0.0
    %272 = vmatpush1.msra.mxu0 %v47
    %273 = vmatprep.subr.mxu0 0.0
    %274 = vmatpush1.msra.mxu0 0.0
    %275 = vmatprep.subr.mxu0 0.0
    %276 = vmatpush1.msra.mxu0 0.0
    %277 = vmatprep.subr.mxu0 0.0
    %278 = vmatpush1.msra.mxu0 0.0
    %279 = vmatprep.subr.mxu0 0.0
    %280 = vmatpush1.msra.mxu0 0.0
    %281 = vmatprep.subr.mxu0 0.0
    %282 = vmatpush1.msra.mxu0 0.0
    %283 = vmatprep.subr.mxu0 0.0
    %284 = vmatpush1.msra.mxu0 0.0
    %285 = vmatprep.subr.mxu0 0.0
    %286 = vmatpush1.msra.mxu0 0.0
    %287 = vmatprep.subr.mxu0 0.0
    %288 = vmatpush1.msra.mxu0 0.0
    %289 = vmatprep.subr.mxu0 0.0
    %290 = vmatpush1.msra.mxu0 0.0
    %291 = vmatprep.subr.mxu0 0.0
    %292 = vmatpush1.msra.mxu0 0.0
    %293 = vmatprep.subr.mxu0 0.0
    %294 = vmatpush1.msra.mxu0 0.0
    %295 = vmatprep.subr.mxu0 0.0
    %296 = vmatpush1.msra.mxu0 0.0
    %297 = vmatprep.subr.mxu0 0.0
    %298 = vmatpush1.msra.mxu0 0.0
    %299 = vmatprep.subr.mxu0 0.0
    %300 = vmatpush1.msra.mxu0 0.0
    %301 = vmatprep.subr.mxu0 0.0
    %302 = vmatpush1.msra.mxu0 0.0
    %303 = vmatprep.subr.mxu0 0.0
    %304 = vmatpush1.msra.mxu0 0.0
    %305 = vmatprep.subr.mxu0 0.0
    %306 = vmatpush1.msra.mxu0 0.0
    %307 = vmatprep.subr.mxu0 0.0
    %308 = vmatpush1.msra.mxu0 0.0
    %309 = vmatprep.subr.mxu0 0.0
    %310 = vmatpush1.msra.mxu0 0.0
    %311 = vmatprep.subr.mxu0 0.0
    %312 = vmatpush1.msra.mxu0 0.0
    %313 = vmatprep.subr.mxu0 0.0
    %314 = vmatpush1.msra.mxu0 0.0
    %315 = vmatprep.subr.mxu0 0.0
    %316 = vmatpush1.msra.mxu0 0.0
    %317 = vmatprep.subr.mxu0 0.0
    %318 = vmatpush1.msra.mxu0 0.0
    %319 = vmatprep.subr.mxu0 0.0
    %320 = vmatpush1.msra.mxu0 0.0
    %321 = vmatprep.mubr.f32.mxu0 0.0
    %322 = vmatmul.mubr.f32.gmra.mrb[0].mxu0 %v255
    %v323 = vpop.f32.mrb[0].mxu0
    %v324 = vadd.f32 %v252, %v323
    %v325 = vpop.f32.mrb[0].mxu0
    %326 = vdwg.mxu0
    %v327 = vmax.f32 %v324, 0.0
    %v328 = vlaneseq
    %v329 = vshrl.u32 %v328, 7
    %v330 = vsub.s32 0, %v329
    %v331 = vrot.slane %v67, %v330
    %v333 = vsel %vm162, %v327, 0
    %335 = vmatprep.subr.mxu0 0.0
    %336 = vmatpush1.msra.mxu0 %v48
    %337 = vmatprep.subr.mxu0 0.0
    %338 = vmatpush1.msra.mxu0 %v49
    %339 = vmatprep.subr.mxu0 0.0
    %340 = vmatpush1.msra.mxu0 %v50
    %341 = vmatprep.subr.mxu0 0.0
    %342 = vmatpush1.msra.mxu0 %v51
    %343 = vmatprep.subr.mxu0 0.0
    %344 = vmatpush1.msra.mxu0 0.0
    %345 = vmatprep.subr.mxu0 0.0
    %346 = vmatpush1.msra.mxu0 0.0
    %347 = vmatprep.subr.mxu0 0.0
    %348 = vmatpush1.msra.mxu0 0.0
    %349 = vmatprep.subr.mxu0 0.0
    %350 = vmatpush1.msra.mxu0 0.0
    %351 = vmatprep.subr.mxu0 0.0
    %352 = vmatpush1.msra.mxu0 0.0
    %353 = vmatprep.subr.mxu0 0.0
    %354 = vmatpush1.msra.mxu0 0.0
    %355 = vmatprep.subr.mxu0 0.0
    %356 = vmatpush1.msra.mxu0 0.0
    %357 = vmatprep.subr.mxu0 0.0
    %358 = vmatpush1.msra.mxu0 0.0
    %359 = vmatprep.subr.mxu0 0.0
    %360 = vmatpush1.msra.mxu0 0.0
    %361 = vmatprep.subr.mxu0 0.0
    %362 = vmatpush1.msra.mxu0 0.0
    %363 = vmatprep.subr.mxu0 0.0
    %364 = vmatpush1.msra.mxu0 0.0
    %365 = vmatprep.subr.mxu0 0.0
    %366 = vmatpush1.msra.mxu0 0.0
    %367 = vmatprep.subr.mxu0 0.0
    %368 = vmatpush1.msra.mxu0 0.0
    %369 = vmatprep.subr.mxu0 0.0
    %370 = vmatpush1.msra.mxu0 0.0
    %371 = vmatprep.subr.mxu0 0.0
    %372 = vmatpush1.msra.mxu0 0.0
    %373 = vmatprep.subr.mxu0 0.0
    %374 = vmatpush1.msra.mxu0 0.0
    %375 = vmatprep.subr.mxu0 0.0
    %376 = vmatpush1.msra.mxu0 0.0
    %377 = vmatprep.subr.mxu0 0.0
    %378 = vmatpush1.msra.mxu0 0.0
    %379 = vmatprep.subr.mxu0 0.0
    %380 = vmatpush1.msra.mxu0 0.0
    %381 = vmatprep.subr.mxu0 0.0
    %382 = vmatpush1.msra.mxu0 0.0
    %383 = vmatprep.subr.mxu0 0.0
    %384 = vmatpush1.msra.mxu0 0.0
    %385 = vmatprep.subr.mxu0 0.0
    %386 = vmatpush1.msra.mxu0 0.0
    %387 = vmatprep.subr.mxu0 0.0
    %388 = vmatpush1.msra.mxu0 0.0
    %389 = vmatprep.subr.mxu0 0.0
    %390 = vmatpush1.msra.mxu0 0.0
    %391 = vmatprep.subr.mxu0 0.0
    %392 = vmatpush1.msra.mxu0 0.0
    %393 = vmatprep.subr.mxu0 0.0
    %394 = vmatpush1.msra.mxu0 0.0
    %395 = vmatprep.subr.mxu0 0.0
    %396 = vmatpush1.msra.mxu0 0.0
    %397 = vmatprep.subr.mxu0 0.0
    %398 = vmatpush1.msra.mxu0 0.0
    %399 = vmatprep.mubr.f32.mxu0 0.0
    %400 = vmatmul.mubr.f32.gmra.mrb[0].mxu0 %v333
    %v401 = vpop.f32.mrb[0].mxu0
    %v402 = vadd.f32 %v331, %v401
    %v403 = vpop.f32.mrb[0].mxu0
    %404 = vdwg.mxu0
    %406 = vrot.lane.b32.xlu0 %v241, 32
    %v407 = vpop.permute.xlu0 %406
    %v409 = vsel %vm162, %v236, %v407
    %v410 = vlaneseq
    %v411 = vshrl.u32 %v410, 7
    %v412 = vsub.s32 0, %v411
    %v413 = vrot.slane %v68, %v412
    %v415 = vsel %vm253, %v409, 0
    %417 = vmatprep.subr.mxu0 0.0
    %418 = vmatpush1.msra.mxu0 %v52
    %419 = vmatprep.subr.mxu0 0.0
    %420 = vmatpush1.msra.mxu0 %v53
    %421 = vmatprep.subr.mxu0 0.0
    %422 = vmatpush1.msra.mxu0 %v54
    %423 = vmatprep.subr.mxu0 0.0
    %424 = vmatpush1.msra.mxu0 %v55
    %425 = vmatprep.subr.mxu0 0.0
    %426 = vmatpush1.msra.mxu0 %v56
    %427 = vmatprep.subr.mxu0 0.0
    %428 = vmatpush1.msra.mxu0 %v57
    %429 = vmatprep.subr.mxu0 0.0
    %430 = vmatpush1.msra.mxu0 %v58
    %431 = vmatprep.subr.mxu0 0.0
    %432 = vmatpush1.msra.mxu0 %v59
    %433 = vmatprep.subr.mxu0 0.0
    %434 = vmatpush1.msra.mxu0 0.0
    %435 = vmatprep.subr.mxu0 0.0
    %436 = vmatpush1.msra.mxu0 0.0
    %437 = vmatprep.subr.mxu0 0.0
    %438 = vmatpush1.msra.mxu0 0.0
    %439 = vmatprep.subr.mxu0 0.0
    %440 = vmatpush1.msra.mxu0 0.0
    %441 = vmatprep.subr.mxu0 0.0
    %442 = vmatpush1.msra.mxu0 0.0
    %443 = vmatprep.subr.mxu0 0.0
    %444 = vmatpush1.msra.mxu0 0.0
    %445 = vmatprep.subr.mxu0 0.0
    %446 = vmatpush1.msra.mxu0 0.0
    %447 = vmatprep.subr.mxu0 0.0
    %448 = vmatpush1.msra.mxu0 0.0
    %449 = vmatprep.subr.mxu0 0.0
    %450 = vmatpush1.msra.mxu0 0.0
    %451 = vmatprep.subr.mxu0 0.0
    %452 = vmatpush1.msra.mxu0 0.0
    %453 = vmatprep.subr.mxu0 0.0
    %454 = vmatpush1.msra.mxu0 0.0
    %455 = vmatprep.subr.mxu0 0.0
    %456 = vmatpush1.msra.mxu0 0.0
    %457 = vmatprep.subr.mxu0 0.0
    %458 = vmatpush1.msra.mxu0 0.0
    %459 = vmatprep.subr.mxu0 0.0
    %460 = vmatpush1.msra.mxu0 0.0
    %461 = vmatprep.subr.mxu0 0.0
    %462 = vmatpush1.msra.mxu0 0.0
    %463 = vmatprep.subr.mxu0 0.0
    %464 = vmatpush1.msra.mxu0 0.0
    %465 = vmatprep.subr.mxu0 0.0
    %466 = vmatpush1.msra.mxu0 0.0
    %467 = vmatprep.subr.mxu0 0.0
    %468 = vmatpush1.msra.mxu0 0.0
    %469 = vmatprep.subr.mxu0 0.0
    %470 = vmatpush1.msra.mxu0 0.0
    %471 = vmatprep.subr.mxu0 0.0
    %472 = vmatpush1.msra.mxu0 0.0
    %473 = vmatprep.subr.mxu0 0.0
    %474 = vmatpush1.msra.mxu0 0.0
    %475 = vmatprep.subr.mxu0 0.0
    %476 = vmatpush1.msra.mxu0 0.0
    %477 = vmatprep.subr.mxu0 0.0
    %478 = vmatpush1.msra.mxu0 0.0
    %479 = vmatprep.subr.mxu0 0.0
    %480 = vmatpush1.msra.mxu0 0.0
    %481 = vmatprep.mubr.f32.mxu0 0.0
    %482 = vmatmul.mubr.f32.gmra.mrb[0].mxu0 %v415
    %v483 = vpop.f32.mrb[0].mxu0
    %v484 = vadd.f32 %v413, %v483
    %v485 = vpop.f32.mrb[0].mxu0
    %486 = vdwg.mxu0
    %v487 = vmax.f32 %v484, 0.0
    %v488 = vlaneseq
    %v489 = vshrl.u32 %v488, 7
    %v490 = vsub.s32 0, %v489
    %v491 = vrot.slane %v69, %v490
    %v493 = vsel %vm162, %v487, 0
    %495 = vmatprep.subr.mxu0 0.0
    %496 = vmatpush1.msra.mxu0 %v60
    %497 = vmatprep.subr.mxu0 0.0
    %498 = vmatpush1.msra.mxu0 %v61
    %499 = vmatprep.subr.mxu0 0.0
    %500 = vmatpush1.msra.mxu0 %v62
    %501 = vmatprep.subr.mxu0 0.0
    %502 = vmatpush1.msra.mxu0 %v63
    %503 = vmatprep.subr.mxu0 0.0
    %504 = vmatpush1.msra.mxu0 0.0
    %505 = vmatprep.subr.mxu0 0.0
    %506 = vmatpush1.msra.mxu0 0.0
    %507 = vmatprep.subr.mxu0 0.0
    %508 = vmatpush1.msra.mxu0 0.0
    %509 = vmatprep.subr.mxu0 0.0
    %510 = vmatpush1.msra.mxu0 0.0
    %511 = vmatprep.subr.mxu0 0.0
    %512 = vmatpush1.msra.mxu0 0.0
    %513 = vmatprep.subr.mxu0 0.0
    %514 = vmatpush1.msra.mxu0 0.0
    %515 = vmatprep.subr.mxu0 0.0
    %516 = vmatpush1.msra.mxu0 0.0
    %517 = vmatprep.subr.mxu0 0.0
    %518 = vmatpush1.msra.mxu0 0.0
    %519 = vmatprep.subr.mxu0 0.0
    %520 = vmatpush1.msra.mxu0 0.0
    %521 = vmatprep.subr.mxu0 0.0
    %522 = vmatpush1.msra.mxu0 0.0
    %523 = vmatprep.subr.mxu0 0.0
    %524 = vmatpush1.msra.mxu0 0.0
    %525 = vmatprep.subr.mxu0 0.0
    %526 = vmatpush1.msra.mxu0 0.0
    %527 = vmatprep.subr.mxu0 0.0
    %528 = vmatpush1.msra.mxu0 0.0
    %529 = vmatprep.subr.mxu0 0.0
    %530 = vmatpush1.msra.mxu0 0.0
    %531 = vmatprep.subr.mxu0 0.0
    %532 = vmatpush1.msra.mxu0 0.0
    %533 = vmatprep.subr.mxu0 0.0
    %534 = vmatpush1.msra.mxu0 0.0
    %535 = vmatprep.subr.mxu0 0.0
    %536 = vmatpush1.msra.mxu0 0.0
    %537 = vmatprep.subr.mxu0 0.0
    %538 = vmatpush1.msra.mxu0 0.0
    %539 = vmatprep.subr.mxu0 0.0
    %540 = vmatpush1.msra.mxu0 0.0
    %541 = vmatprep.subr.mxu0 0.0
    %542 = vmatpush1.msra.mxu0 0.0
    %543 = vmatprep.subr.mxu0 0.0
    %544 = vmatpush1.msra.mxu0 0.0
    %545 = vmatprep.subr.mxu0 0.0
    %546 = vmatpush1.msra.mxu0 0.0
    %547 = vmatprep.subr.mxu0 0.0
    %548 = vmatpush1.msra.mxu0 0.0
    %549 = vmatprep.subr.mxu0 0.0
    %550 = vmatpush1.msra.mxu0 0.0
    %551 = vmatprep.subr.mxu0 0.0
    %552 = vmatpush1.msra.mxu0 0.0
    %553 = vmatprep.subr.mxu0 0.0
    %554 = vmatpush1.msra.mxu0 0.0
    %555 = vmatprep.subr.mxu0 0.0
    %556 = vmatpush1.msra.mxu0 0.0
    %557 = vmatprep.subr.mxu0 0.0
    %558 = vmatpush1.msra.mxu0 0.0
    %559 = vmatprep.mubr.f32.mxu0 0.0
    %560 = vmatmul.mubr.f32.gmra.mrb[0].mxu0 %v493
    %v561 = vpop.f32.mrb[0].mxu0
    %v562 = vadd.f32 %v491, %v561
    %v563 = vpop.f32.mrb[0].mxu0
    %564 = vdwg.mxu0
    %s565 = sld [smem:[#allocation2]]
    %v566 = vsub.f32 %v402, %v241
    %v567 = vmul.f32 %v566, %v566
    %v568 = vsel %vm162, %v567, 0.0
    %569 = vadd.xlane.f32.xlu0 %v568
    %v570 = vpop.xlane.xlu0 %569
    %v571 = vrot.slane %v570, 4
    %v572 = vadd.f32 %v570, %v571
    %v573 = vrot.slane %v572, 2
    %v574 = vadd.f32 %v572, %v573
    %v575 = vrot.slane %v574, 1
    %v576 = vadd.f32 %v574, %v575
    %s577 = vtos %v576
    %s578 = sadd.f32 %s565, %s577
    %s579 = scalar_lea.smem [#allocation2], 0
    %580 = sst [smem:[%s579]] %s578
    %s581 = sld [smem:[#allocation2 + $0x1]]
    %v582 = vsub.f32 %v562, %v33
    %v583 = vmul.f32 %v582, %v582
    %v584 = vsel %vm162, %v583, 0.0
    %585 = vadd.xlane.f32.xlu0 %v584
    %v586 = vpop.xlane.xlu0 %585
    %v587 = vrot.slane %v586, 4
    %v588 = vadd.f32 %v586, %v587
    %v589 = vrot.slane %v588, 2
    %v590 = vadd.f32 %v588, %v589
    %v591 = vrot.slane %v590, 1
    %v592 = vadd.f32 %v590, %v591
    %s593 = vtos %v592
    %s594 = sadd.f32 %s581, %s593
    %s595 = scalar_lea.smem [#allocation2], 1
    %596 = sst [smem:[%s595]] %s594
    // Predicated region
    $region26: #{icm_forward.1} parent=1 // pred_check
      %p597 = pneg %p21
    $region27: #{icm_forward.1} parent=1 // pred_check_branch
      %599 = sbr.rel (%p597) target = $region29
    $region28: #{icm_forward.1} parent=1 // pred_region
      %s600 = sld [smem:[#allocation2]]
      %s601 = smul.f32 %s600, 0.00390625
      %s602 = scalar_lea.smem [#allocation3], 0
      %603 = sst [smem:[%s602]] %s601
      %s604 = sld [smem:[#allocation2 + $0x1]]
      %s605 = smul.f32 %s604, 0.015625
      %s606 = scalar_lea.smem [#allocation3], 1
      %607 = sst [smem:[%s606]] %s605
    $region29: #{icm_forward.1} parent=1 // pred_fallthru
      _
    // Predicated region
    $region30: #{icm_forward.1} parent=1 // pred_check
      _
    $region31: #{icm_forward.1} parent=1 // pred_check_branch
      %609 = sbr.rel (0) target = $region33
    $region32: #{icm_forward.1} parent=1 // pred_region
      %s611 = ssub.s32 16, 16
      %612 = vsyncadd [#allocation4], %s611
      %s614 = sshll.u32 %s5, 4
      %s615 = int_to_ptr.vmem [resolvable:$true] %s614
      %617 = dma.smem_to_vmem [#allocation3], 16, %s615, [#allocation4]
    $region33: #{icm_forward.1} parent=1 // pred_fallthru
      _
    // Predicated region
    $region34: #{icm_forward.1} parent=1 // pred_check
      _
    $region35: #{icm_forward.1} parent=1 // pred_check_branch
      %619 = sbr.rel (0) target = $region37
    $region36: #{icm_forward.1} parent=1 // pred_region
      %620 = dma.done [#allocation4], 16
    $region37: #{icm_forward.1} parent=1 // pred_fallthru
      _
    %621 = sfence
    %622 = vsyncpa [#allocation4], 1

</llo_original>
